<compile_context>
chip_gen: v6e
topology: v6e:2x2x1
jax: 0.10.0
libtpu: 0.0.40
codegen_flags: <defaults>
</compile_context>

<pallas_src>
import jax
import jax.numpy as jnp
from jax.experimental import pallas as pl
from jax.experimental.pallas import tpu as pltpu


def _scale_mul_kernel(x_ref, s_ref, o_ref):
    # x_ref: (1, TC, HW) activation tile (channels on sublanes, spatial on lanes).
    # s_ref: (1, TC, 1)  per-channel scale column -> lane-splat broadcast.
    o_ref[...] = x_ref[...] * s_ref[...]


def _vmem_capacity_bytes():
    """Physical VMEM capacity for the current chip; conservative fallback."""
    try:
        info = pltpu.get_tpu_info()
        cap = getattr(info, "vmem_capacity_bytes", None)
        if cap:
            return int(cap)
    except Exception:
        pass
    return 64 << 20  # v7x per-TensorCore VMEM (smallest of the three generations)


def _sublane_multiple(dtype):
    itemsize = jnp.dtype(dtype).itemsize
    if itemsize >= 4:
        return 8    # f32 / i32
    if itemsize == 2:
        return 16   # bf16 / f16 pack 2 rows per sublane
    return 32       # int8 / fp8 pack 4 rows per sublane


def _pick_chan_tile(n_batches, c, hw, dtype, vmem_cap):
    """Channel-tile (sublane) size for the (1, TC, HW) x block.

    Keeps the double-buffered in+out tiles (~4x tile bytes) around 1/4 of the
    chip's physical VMEM on every generation, rounds TC to the dtype's packing
    multiple, and guarantees >=2 grid steps for single-batch inputs so both
    v7x TensorCores get work.
    """
    sub = _sublane_multiple(dtype)
    itemsize = jnp.dtype(dtype).itemsize
    per_tile_budget = max(1 << 20, vmem_cap // 16)
    row_bytes = max(1, hw * itemsize)

    tc = (per_tile_budget // row_bytes) // sub * sub
    tc = max(sub, tc)

    if tc >= c:
        tc = c  # full channel extent is always a legal block dim
        if n_batches == 1 and c > sub:
            # Split C into ~2 blocks (rounded up to the sublane multiple) so the
            # "parallel" grid has >=2 steps for megacore sharding on v7x.
            half = -(-((c + 1) // 2) // sub) * sub
            if half >= c:
                half = max(sub, (c // 2) // sub * sub)
            tc = max(sub, min(half, c))
    return int(tc)


def channelwise_mul(x, scale):
    """x: (N, C, H, W), scale: (N, C, 1, 1) -> (N, C, H, W), elementwise x * scale."""
    N, C, H, W = x.shape
    assert scale.shape == (N, C, 1, 1)
    HW = H * W

    # Native NCHW layout: contiguous collapse of the spatial dims (free reshape,
    # no transpose). Channels land on sublanes, spatial on lanes.
    x3 = x.reshape(N, C, HW)
    s3 = scale.reshape(N, C, 1)

    vmem_cap = _vmem_capacity_bytes()
    TC = _pick_chan_tile(N, C, HW, x.dtype, vmem_cap)
    grid = (N, pl.cdiv(C, TC))

    itemsize = jnp.dtype(x.dtype).itemsize
    tile_bytes = TC * HW * itemsize
    # Double-buffered input + output tiles plus headroom, never past ~half of
    # physical VMEM (so it is safe on v7x's 64 MiB just as on 128 MiB chips).
    vmem_limit = int(min(vmem_cap // 2, max(32 << 20, 6 * tile_bytes)))

    cost = pl.CostEstimate(
        flops=N * C * HW,
        transcendentals=0,
        bytes_accessed=2 * N * C * HW * itemsize + N * C * itemsize,
    )

    out3 = pl.pallas_call(
        _scale_mul_kernel,
        out_shape=jax.ShapeDtypeStruct((N, C, HW), x.dtype),
        grid=grid,
        in_specs=[
            pl.BlockSpec((1, TC, HW), lambda n, c: (n, c, 0)),
            pl.BlockSpec((1, TC, 1), lambda n, c: (n, c, 0)),
        ],
        out_specs=pl.BlockSpec((1, TC, HW), lambda n, c: (n, c, 0)),
        compiler_params=pltpu.CompilerParams(
            # Both grid axes are independent -> software pipelining of channel
            # tiles everywhere and megacore sharding on v7x.
            dimension_semantics=("parallel", "parallel"),
            vmem_limit_bytes=vmem_limit,
        ),
        cost_estimate=cost,
    )(x3, s3)

    # Free reshape back to the module's NCHW output shape.
    return out3.reshape(N, C, H, W)


if __name__ == "__main__":
    key = jax.random.PRNGKey(0)
    k1, k2 = jax.random.split(key)

    # Small shapes consistent with the module's forward (NCHW activation,
    # (N, C, 1, 1) channel gate); original was (1, 2064, 7, 7) x (1, 2064, 1, 1).
    N, C, H, W = 2, 256, 7, 7
    x507 = jax.random.normal(k1, (N, C, H, W), dtype=jnp.float32)
    x512 = jax.random.normal(k2, (N, C, 1, 1), dtype=jnp.float32)

    out = channelwise_mul(x507, x512)
    out = jax.block_until_ready(out)

    # Reference check (plain JAX broadcasting, same as torch's operator.mul).
    ref = x507 * x512
    assert out.shape == ref.shape
    assert jnp.allclose(out, ref, atol=1e-6, rtol=1e-6)

    print("KERNEL_OK")
</pallas_src>

<mosaic_0001>
module attributes {stable_mosaic.version = 11 : i64} {
  func.func @_scale_mul_kernel(%arg0: i32, %arg1: i32, %arg2: memref<1x256x49xf32, #tpu.memory_space<vmem>>, %arg3: memref<1x256x1xf32, #tpu.memory_space<vmem>>, %arg4: memref<1x256x49xf32, #tpu.memory_space<vmem>>) attributes {dimension_semantics = [#tpu.dimension_semantics<parallel>, #tpu.dimension_semantics<parallel>], iteration_bounds = array<i64: 2, 1>, scalar_prefetch = 0 : i64, scratch_operands = 0 : i64, tpu.core_type = #tpu.core_type<tc>, window_params = [{transform_indices = @transform_0, window_bounds = array<i64: 1, 256, 49>}, {transform_indices = @transform_1, window_bounds = array<i64: 1, 256, 1>}, {transform_indices = @transform_2, window_bounds = array<i64: 1, 256, 49>}]} {
    %c0 = arith.constant 0 : index
    %c0_0 = arith.constant 0 : index
    %c0_1 = arith.constant 0 : index
    %0 = vector.load %arg2[%c0, %c0_0, %c0_1] : memref<1x256x49xf32, #tpu.memory_space<vmem>>, vector<1x256x49xf32>
    %c0_2 = arith.constant 0 : index
    %c0_3 = arith.constant 0 : index
    %c0_4 = arith.constant 0 : index
    %1 = vector.load %arg3[%c0_2, %c0_3, %c0_4] : memref<1x256x1xf32, #tpu.memory_space<vmem>>, vector<1x256x1xf32>
    %2 = vector.broadcast %1 : vector<1x256x1xf32> to vector<1x256x49xf32>
    %3 = arith.mulf %0, %2 : vector<1x256x49xf32>
    %c0_5 = arith.constant 0 : index
    %c0_6 = arith.constant 0 : index
    %c0_7 = arith.constant 0 : index
    %4 = vector.load %arg4[%c0_5, %c0_6, %c0_7] : memref<1x256x49xf32, #tpu.memory_space<vmem>>, vector<1x256x49xf32>
    tpu.vector_store %arg4[%c0_5, %c0_6, %c0_7], %3 {strides = array<i32>} : memref<1x256x49xf32, #tpu.memory_space<vmem>>, vector<1x256x49xf32>,
    return
  }
  func.func @transform_0(%arg0: i32, %arg1: i32) -> (i32, i32, i32) {
    %c0_i32 = arith.constant 0 : i32
    %c0_i32_0 = arith.constant 0 : i32
    return %arg0, %arg1, %c0_i32 : i32, i32, i32
  }
  func.func @transform_1(%arg0: i32, %arg1: i32) -> (i32, i32, i32) {
    %c0_i32 = arith.constant 0 : i32
    %c0_i32_0 = arith.constant 0 : i32
    return %arg0, %arg1, %c0_i32 : i32, i32, i32
  }
  func.func @transform_2(%arg0: i32, %arg1: i32) -> (i32, i32, i32) {
    %c0_i32 = arith.constant 0 : i32
    %c0_i32_0 = arith.constant 0 : i32
    return %arg0, %arg1, %c0_i32 : i32, i32, i32
  }
}

</mosaic_0001>

<llo_original>
// kernel: tpu_custom_call.1
$region0: #{tpu_custom_call.1}
  #allocation0 [shape = 'u32[]', space=smem, size = 0x4, offset = 0x4, fixed_abs, tag = 'smem constant byte address 0x4 - core index']
  #allocation1 [shape = 'u32[144,128]{1,0:T(1,128)}', space=vmem, size = 0x12000, scoped, tag = 'internal scratch']
  %s0 = inlined_call_operand.vmem [shape: f32[2,256,49], index: 0, kind: input, shape index: {}]
  %s1 = inlined_call_operand.vmem [shape: f32[2,256,1], index: 1, kind: input, shape index: {}]
  %s2 = inlined_call_operand.vmem [shape: f32[2,256,49], index: 2, kind: output, shape index: {}]
  %s3 = sld [smem:[#allocation0]]
  $region41: #{tpu_custom_call.1} parent=0
    _
  %s5 = ssub.s32 1, %s3
  %s6 = scalar_select 0, %s5, %s3
  loop: start=0, step=1, limit=4
  $region2: #{tpu_custom_call.1} parent=0 // loop_pre_header
    _
  $region3: #{tpu_custom_call.1} parent=0 // loop_header
    %s8 = sphi 0, %s12
    %p9 = scmp.ge.s32.totalorder %s8, 4
    %s15 = sphi 0, %s27
    %s16 = sphi 0, %s23
    %s17 = sphi 0, %s15
    %s18 = sphi 0, %s16
    %s19 = sphi 0, %s17
    %s20 = sphi 0, %s18
    %s32 = sphi 0, %s34
    %s35 = sphi 0, %s32
    %s36 = sphi 0, %s35
    %s52 = sphi 0, %s36
    %s60 = sphi 0, %s62
    %s63 = sphi 0, %s60
    %s64 = sphi 0, %s63
    %s80 = sphi 0, %s64
    %s88 = sphi 0, %s90
    %s91 = sphi 0, %s88
    %s92 = sphi 0, %s91
    %s108 = sphi 0, %s92
  $region4: #{tpu_custom_call.1} parent=0 // loop_header_branch
    %11 = sbr.rel (%p9) target = $region8
  $region5: #{tpu_custom_call.1} parent=0 // loop_body
    %s13 = ssub.s32 %s8, 1
    %s14 = ssub.s32 %s8, 2
    %s21 = sadd.s32 1, %s16
    %p22 = scmp.ge.s32.totalorder %s21, 1
    %s23 = scalar_select %p22, 0, %s21
    %s24 = sadd.s32 1, %s15
    %s25 = scalar_select %p22, %s24, %s15
    %p26 = scmp.ge.s32.totalorder %s25, 2
    %s27 = scalar_select %p26, 0, %s25
    %s28 = ssub.s32 %s15, %s27
    %s29 = ssub.s32 %s16, %s23
    %s30 = sor.u32 %s28, %s29
    %p31 = scmp.eq.s32.totalorder %s30, 0
    %s33 = sadd.s32 %s32, 1
    %s34 = scalar_select %p31, %s32, %s33
    %p37 = pneg %p31
    %p38 = scmp.eq.s32.totalorder %s8, 1
    %p39 = por %p37, %p38
    %p40 = scmp.ne.s32.totalorder %s32, %s35
    %p41 = scmp.eq.s32.totalorder %s8, 0
    %p42 = por %p40, %p41
    %p43 = scmp.ne.s32.totalorder %s32, %s35
    %p44 = scmp.eq.s32.totalorder %s13, 1
    %p45 = por %p43, %p44
    %p46 = scmp.ne.s32.totalorder %s35, %s36
    %p47 = scmp.eq.s32.totalorder %s13, 0
    %p48 = por %p46, %p47
    %p49 = scmp.ne.s32.totalorder %s35, %s36
    %p50 = scmp.eq.s32.totalorder %s14, 1
    %p51 = por %p49, %p50
    %p53 = scmp.ne.s32.totalorder %s36, %s52
    %p54 = scmp.eq.s32.totalorder %s14, 0
    %p55 = por %p53, %p54
    %s56 = ssub.s32 %s15, %s27
    %s57 = ssub.s32 %s16, %s23
    %s58 = sor.u32 %s56, %s57
    %p59 = scmp.eq.s32.totalorder %s58, 0
    %s61 = sadd.s32 %s60, 1
    %s62 = scalar_select %p59, %s60, %s61
    %p65 = pneg %p59
    %p66 = scmp.eq.s32.totalorder %s8, 1
    %p67 = por %p65, %p66
    %p68 = scmp.ne.s32.totalorder %s60, %s63
    %p69 = scmp.eq.s32.totalorder %s8, 0
    %p70 = por %p68, %p69
    %p71 = scmp.ne.s32.totalorder %s60, %s63
    %p72 = scmp.eq.s32.totalorder %s13, 1
    %p73 = por %p71, %p72
    %p74 = scmp.ne.s32.totalorder %s63, %s64
    %p75 = scmp.eq.s32.totalorder %s13, 0
    %p76 = por %p74, %p75
    %p77 = scmp.ne.s32.totalorder %s63, %s64
    %p78 = scmp.eq.s32.totalorder %s14, 1
    %p79 = por %p77, %p78
    %p81 = scmp.ne.s32.totalorder %s64, %s80
    %p82 = scmp.eq.s32.totalorder %s14, 0
    %p83 = por %p81, %p82
    %s84 = ssub.s32 %s15, %s27
    %s85 = ssub.s32 %s16, %s23
    %s86 = sor.u32 %s84, %s85
    %p87 = scmp.eq.s32.totalorder %s86, 0
    %s89 = sadd.s32 %s88, 1
    %s90 = scalar_select %p87, %s88, %s89
    %p93 = pneg %p87
    %p94 = scmp.eq.s32.totalorder %s8, 1
    %p95 = por %p93, %p94
    %p96 = scmp.ne.s32.totalorder %s88, %s91
    %p97 = scmp.eq.s32.totalorder %s8, 0
    %p98 = por %p96, %p97
    %p99 = scmp.ne.s32.totalorder %s88, %s91
    %p100 = scmp.eq.s32.totalorder %s13, 1
    %p101 = por %p99, %p100
    %p102 = scmp.ne.s32.totalorder %s91, %s92
    %p103 = scmp.eq.s32.totalorder %s13, 0
    %p104 = por %p102, %p103
    %p105 = scmp.ne.s32.totalorder %s91, %s92
    %p106 = scmp.eq.s32.totalorder %s14, 1
    %p107 = por %p105, %p106
    %p109 = scmp.ne.s32.totalorder %s92, %s108
    %p110 = scmp.eq.s32.totalorder %s14, 0
    %p111 = por %p109, %p110
    %p112 = scmp.le.s32.totalorder 1, %s8
    %p113 = scmp.lt.s32.totalorder %s8, 3
    %p114 = pnand %p112, %p113
    %p115 = pneg %p114
    // Predicated region
    $region9: #{tpu_custom_call.1} parent=5 // pred_check
      _
    $region10: #{tpu_custom_call.1} parent=5 // pred_check_branch
      %117 = sbr.rel (%p114) target = $region12
    $region11: #{tpu_custom_call.1} parent=5 // pred_region
      %s118 = ssub.s32 %s8, 1
    $region12: #{tpu_custom_call.1} parent=5 // pred_fallthru
      _
    %p119 = scmp.lt.s32.totalorder %s8, 2
    // Predicated region
    $region13: #{tpu_custom_call.1} parent=5 // pred_check
      %p120 = pneg %p119
    $region14: #{tpu_custom_call.1} parent=5 // pred_check_branch
      %122 = sbr.rel (%p120) target = $region16
    $region15: #{tpu_custom_call.1} parent=5 // pred_region
      // Predicated region
      $region17: #{tpu_custom_call.1} parent=15 // pred_check
        %p123 = pneg %p42
      $region18: #{tpu_custom_call.1} parent=15 // pred_check_branch
        %125 = sbr.rel (%p123) target = $region20
      $region19: #{tpu_custom_call.1} parent=15 // pred_region
        %s126 = smul.u32 32, %s16
        %p127 = scmp.lt.s32.totalorder %s15, 1
        %s128 = scalar_select %p127, %s15, 1
        %p129 = scmp.lt.s32.totalorder %s126, 31
        %s130 = scalar_select %p129, %s126, 31
        %s131 = smul.addr %s128, 32
        %s132 = sadd.s32 %s130, %s131
        %s133 = smul.addr %s132, 8
        %s134 = scalar_lea.vmem %s0, %s133
        %s135 = smul.u32 32, %s16
      $region20: #{tpu_custom_call.1} parent=15 // pred_fallthru
        _
      // Predicated region
      $region21: #{tpu_custom_call.1} parent=15 // pred_check
        %p136 = pneg %p70
      $region22: #{tpu_custom_call.1} parent=15 // pred_check_branch
        %138 = sbr.rel (%p136) target = $region24
      $region23: #{tpu_custom_call.1} parent=15 // pred_region
        %s139 = smul.u32 32, %s16
        %p140 = scmp.lt.s32.totalorder %s15, 1
        %s141 = scalar_select %p140, %s15, 1
        %p142 = scmp.lt.s32.totalorder %s139, 31
        %s143 = scalar_select %p142, %s139, 31
        %s144 = smul.addr %s141, 32
        %s145 = sadd.s32 %s143, %s144
        %s146 = smul.addr %s145, 8
        %s147 = scalar_lea.vmem %s1, %s146
        %s148 = smul.u32 32, %s16
      $region24: #{tpu_custom_call.1} parent=15 // pred_fallthru
        _
    $region16: #{tpu_custom_call.1} parent=5 // pred_fallthru
      _
    %p149 = scmp.le.s32.totalorder 1, %s8
    %p150 = scmp.lt.s32.totalorder %s8, 3
    %p151 = pnand %p149, %p150
    %p152 = pneg %p151
    // Predicated region
    $region25: #{tpu_custom_call.1} parent=5 // pred_check
      _
    $region26: #{tpu_custom_call.1} parent=5 // pred_check_branch
      %154 = sbr.rel (%p151) target = $region28
    $region27: #{tpu_custom_call.1} parent=5 // pred_region
      %s155 = ssub.s32 %s8, 1
      %s156 = smul.u32 32, %s18
      %p157 = scmp.lt.s32.totalorder %s17, 1
      %s158 = scalar_select %p157, %s17, 1
      %p159 = scmp.lt.s32.totalorder %s156, 31
      %s160 = scalar_select %p159, %s156, 31
      %s161 = smul.addr %s158, 32
      %s162 = sadd.s32 %s160, %s161
      %s163 = smul.addr %s162, 8
      %s164 = scalar_lea.vmem %s0, %s163
      %p165 = pneg %p48
      %p166 = pneg %p45
      %s167 = smul.u32 32, %s18
      %p168 = scmp.lt.s32.totalorder %s17, 1
      %s169 = scalar_select %p168, %s17, 1
      %p170 = scmp.lt.s32.totalorder %s167, 31
      %s171 = scalar_select %p170, %s167, 31
      %s172 = smul.addr %s169, 32
      %s173 = sadd.s32 %s171, %s172
      %s174 = smul.addr %s173, 8
      %s175 = scalar_lea.vmem %s1, %s174
      %p176 = pneg %p76
      %p177 = pneg %p73
      %p178 = pneg %p104
      %p179 = pneg %p101
      %s180 = smul.u32 32, %s18
      %p181 = scmp.lt.s32.totalorder %s17, 1
      %s182 = scalar_select %p181, %s17, 1
      %p183 = scmp.lt.s32.totalorder %s180, 31
      %s184 = scalar_select %p183, %s180, 31
      %s185 = smul.addr %s182, 32
      %s186 = sadd.s32 %s184, %s185
      %s187 = smul.addr %s186, 8
      %s188 = scalar_lea.vmem %s2, %s187
      %s189 = smul.u32 32, %s18
      %p190 = scmp.lt.s32.totalorder %s17, 1
      %s191 = scalar_select %p190, %s17, 1
      %p192 = scmp.lt.s32.totalorder %s189, 31
      %s193 = scalar_select %p192, %s189, 31
      %s194 = smul.addr %s191, 32
      %s195 = sadd.s32 %s193, %s194
      %s196 = smul.addr %s195, 8
      %s197 = scalar_lea.vmem %s0, %s196
      %s198 = smul.u32 32, %s18
      %s199 = smul.u32 32, %s18
      %p200 = scmp.lt.s32.totalorder %s17, 1
      %s201 = scalar_select %p200, %s17, 1
      %p202 = scmp.lt.s32.totalorder %s199, 31
      %s203 = scalar_select %p202, %s199, 31
      %s204 = smul.addr %s201, 32
      %s205 = sadd.s32 %s203, %s204
      %s206 = smul.addr %s205, 8
      %s207 = scalar_lea.vmem %s1, %s206
      %s208 = smul.u32 32, %s18
      %s209 = smul.u32 32, %s18
      %p210 = scmp.lt.s32.totalorder %s17, 1
      %s211 = scalar_select %p210, %s17, 1
      %p212 = scmp.lt.s32.totalorder %s209, 31
      %s213 = scalar_select %p212, %s209, 31
      %s214 = smul.addr %s211, 32
      %s215 = sadd.s32 %s213, %s214
      %s216 = smul.addr %s215, 8
      %s217 = scalar_lea.vmem %s2, %s216
      %s218 = smul.u32 32, %s18
      %v219 = vld [vmem:[%s197] sm:$0xff]
      %v220 = vld [vmem:[%s197 + $0x8] sm:$0xff]
      %v221 = vld [vmem:[%s197 + $0x10] sm:$0xff]
      %v222 = vld [vmem:[%s197 + $0x18] sm:$0xff]
      %v223 = vld [vmem:[%s197 + $0x20] sm:$0xff]
      %v224 = vld [vmem:[%s197 + $0x28] sm:$0xff]
      %v225 = vld [vmem:[%s197 + $0x30] sm:$0xff]
      %v226 = vld [vmem:[%s197 + $0x38] sm:$0xff]
      %v227 = vld [vmem:[%s197 + $0x40] sm:$0xff]
      %v228 = vld [vmem:[%s197 + $0x48] sm:$0xff]
      %v229 = vld [vmem:[%s197 + $0x50] sm:$0xff]
      %v230 = vld [vmem:[%s197 + $0x58] sm:$0xff]
      %v231 = vld [vmem:[%s197 + $0x60] sm:$0xff]
      %v232 = vld [vmem:[%s197 + $0x68] sm:$0xff]
      %v233 = vld [vmem:[%s197 + $0x70] sm:$0xff]
      %v234 = vld [vmem:[%s197 + $0x78] sm:$0xff]
      %v235 = vld [vmem:[%s197 + $0x80] sm:$0xff]
      %v236 = vld [vmem:[%s197 + $0x88] sm:$0xff]
      %v237 = vld [vmem:[%s197 + $0x90] sm:$0xff]
      %v238 = vld [vmem:[%s197 + $0x98] sm:$0xff]
      %v239 = vld [vmem:[%s197 + $0xa0] sm:$0xff]
      %v240 = vld [vmem:[%s197 + $0xa8] sm:$0xff]
      %v241 = vld [vmem:[%s197 + $0xb0] sm:$0xff]
      %v242 = vld [vmem:[%s197 + $0xb8] sm:$0xff]
      %v243 = vld [vmem:[%s197 + $0xc0] sm:$0xff]
      %v244 = vld [vmem:[%s197 + $0xc8] sm:$0xff]
      %v245 = vld [vmem:[%s197 + $0xd0] sm:$0xff]
      %v246 = vld [vmem:[%s197 + $0xd8] sm:$0xff]
      %v247 = vld [vmem:[%s197 + $0xe0] sm:$0xff]
      %v248 = vld [vmem:[%s197 + $0xe8] sm:$0xff]
      %v249 = vld [vmem:[%s197 + $0xf0] sm:$0xff]
      %v250 = vld [vmem:[%s197 + $0xf8] sm:$0xff]
      %v251 = vld [vmem:[%s207] sm:$0xff]
      %v252 = vld [vmem:[%s207 + $0x8] sm:$0xff]
      %v253 = vld [vmem:[%s207 + $0x10] sm:$0xff]
      %v254 = vld [vmem:[%s207 + $0x18] sm:$0xff]
      %v255 = vld [vmem:[%s207 + $0x20] sm:$0xff]
      %v256 = vld [vmem:[%s207 + $0x28] sm:$0xff]
      %v257 = vld [vmem:[%s207 + $0x30] sm:$0xff]
      %v258 = vld [vmem:[%s207 + $0x38] sm:$0xff]
      %v259 = vld [vmem:[%s207 + $0x40] sm:$0xff]
      %v260 = vld [vmem:[%s207 + $0x48] sm:$0xff]
      %v261 = vld [vmem:[%s207 + $0x50] sm:$0xff]
      %v262 = vld [vmem:[%s207 + $0x58] sm:$0xff]
      %v263 = vld [vmem:[%s207 + $0x60] sm:$0xff]
      %v264 = vld [vmem:[%s207 + $0x68] sm:$0xff]
      %v265 = vld [vmem:[%s207 + $0x70] sm:$0xff]
      %v266 = vld [vmem:[%s207 + $0x78] sm:$0xff]
      %v267 = vld [vmem:[%s207 + $0x80] sm:$0xff]
      %v268 = vld [vmem:[%s207 + $0x88] sm:$0xff]
      %v269 = vld [vmem:[%s207 + $0x90] sm:$0xff]
      %v270 = vld [vmem:[%s207 + $0x98] sm:$0xff]
      %v271 = vld [vmem:[%s207 + $0xa0] sm:$0xff]
      %v272 = vld [vmem:[%s207 + $0xa8] sm:$0xff]
      %v273 = vld [vmem:[%s207 + $0xb0] sm:$0xff]
      %v274 = vld [vmem:[%s207 + $0xb8] sm:$0xff]
      %v275 = vld [vmem:[%s207 + $0xc0] sm:$0xff]
      %v276 = vld [vmem:[%s207 + $0xc8] sm:$0xff]
      %v277 = vld [vmem:[%s207 + $0xd0] sm:$0xff]
      %v278 = vld [vmem:[%s207 + $0xd8] sm:$0xff]
      %v279 = vld [vmem:[%s207 + $0xe0] sm:$0xff]
      %v280 = vld [vmem:[%s207 + $0xe8] sm:$0xff]
      %v281 = vld [vmem:[%s207 + $0xf0] sm:$0xff]
      %v282 = vld [vmem:[%s207 + $0xf8] sm:$0xff]
      %284 = vset.pattern.permute.xlu0 0
      %285 = vperm.xlu0 %284, %v251
      %v286 = vpop.permute.xlu0 %285
      %289 = vset.pattern.permute.xlu0 0
      %290 = vperm.xlu0 %289, %v252
      %v291 = vpop.permute.xlu0 %290
      %294 = vset.pattern.permute.xlu0 0
      %295 = vperm.xlu0 %294, %v253
      %v296 = vpop.permute.xlu0 %295
      %299 = vset.pattern.permute.xlu0 0
      %300 = vperm.xlu0 %299, %v254
      %v301 = vpop.permute.xlu0 %300
      %304 = vset.pattern.permute.xlu0 0
      %305 = vperm.xlu0 %304, %v255
      %v306 = vpop.permute.xlu0 %305
      %309 = vset.pattern.permute.xlu0 0
      %310 = vperm.xlu0 %309, %v256
      %v311 = vpop.permute.xlu0 %310
      %314 = vset.pattern.permute.xlu0 0
      %315 = vperm.xlu0 %314, %v257
      %v316 = vpop.permute.xlu0 %315
      %319 = vset.pattern.permute.xlu0 0
      %320 = vperm.xlu0 %319, %v258
      %v321 = vpop.permute.xlu0 %320
      %324 = vset.pattern.permute.xlu0 0
      %325 = vperm.xlu0 %324, %v259
      %v326 = vpop.permute.xlu0 %325
      %329 = vset.pattern.permute.xlu0 0
      %330 = vperm.xlu0 %329, %v260
      %v331 = vpop.permute.xlu0 %330
      %334 = vset.pattern.permute.xlu0 0
      %335 = vperm.xlu0 %334, %v261
      %v336 = vpop.permute.xlu0 %335
      %339 = vset.pattern.permute.xlu0 0
      %340 = vperm.xlu0 %339, %v262
      %v341 = vpop.permute.xlu0 %340
      %344 = vset.pattern.permute.xlu0 0
      %345 = vperm.xlu0 %344, %v263
      %v346 = vpop.permute.xlu0 %345
      %349 = vset.pattern.permute.xlu0 0
      %350 = vperm.xlu0 %349, %v264
      %v351 = vpop.permute.xlu0 %350
      %354 = vset.pattern.permute.xlu0 0
      %355 = vperm.xlu0 %354, %v265
      %v356 = vpop.permute.xlu0 %355
      %359 = vset.pattern.permute.xlu0 0
      %360 = vperm.xlu0 %359, %v266
      %v361 = vpop.permute.xlu0 %360
      %364 = vset.pattern.permute.xlu0 0
      %365 = vperm.xlu0 %364, %v267
      %v366 = vpop.permute.xlu0 %365
      %369 = vset.pattern.permute.xlu0 0
      %370 = vperm.xlu0 %369, %v268
      %v371 = vpop.permute.xlu0 %370
      %374 = vset.pattern.permute.xlu0 0
      %375 = vperm.xlu0 %374, %v269
      %v376 = vpop.permute.xlu0 %375
      %379 = vset.pattern.permute.xlu0 0
      %380 = vperm.xlu0 %379, %v270
      %v381 = vpop.permute.xlu0 %380
      %384 = vset.pattern.permute.xlu0 0
      %385 = vperm.xlu0 %384, %v271
      %v386 = vpop.permute.xlu0 %385
      %389 = vset.pattern.permute.xlu0 0
      %390 = vperm.xlu0 %389, %v272
      %v391 = vpop.permute.xlu0 %390
      %394 = vset.pattern.permute.xlu0 0
      %395 = vperm.xlu0 %394, %v273
      %v396 = vpop.permute.xlu0 %395
      %399 = vset.pattern.permute.xlu0 0
      %400 = vperm.xlu0 %399, %v274
      %v401 = vpop.permute.xlu0 %400
      %404 = vset.pattern.permute.xlu0 0
      %405 = vperm.xlu0 %404, %v275
      %v406 = vpop.permute.xlu0 %405
      %409 = vset.pattern.permute.xlu0 0
      %410 = vperm.xlu0 %409, %v276
      %v411 = vpop.permute.xlu0 %410
      %414 = vset.pattern.permute.xlu0 0
      %415 = vperm.xlu0 %414, %v277
      %v416 = vpop.permute.xlu0 %415
      %419 = vset.pattern.permute.xlu0 0
      %420 = vperm.xlu0 %419, %v278
      %v421 = vpop.permute.xlu0 %420
      %424 = vset.pattern.permute.xlu0 0
      %425 = vperm.xlu0 %424, %v279
      %v426 = vpop.permute.xlu0 %425
      %429 = vset.pattern.permute.xlu0 0
      %430 = vperm.xlu0 %429, %v280
      %v431 = vpop.permute.xlu0 %430
      %434 = vset.pattern.permute.xlu0 0
      %435 = vperm.xlu0 %434, %v281
      %v436 = vpop.permute.xlu0 %435
      %439 = vset.pattern.permute.xlu0 0
      %440 = vperm.xlu0 %439, %v282
      %v441 = vpop.permute.xlu0 %440
      %v443 = vmul.f32 %v219, %v286
      %v444 = vmul.f32 %v220, %v291
      %v445 = vmul.f32 %v221, %v296
      %v446 = vmul.f32 %v222, %v301
      %v447 = vmul.f32 %v223, %v306
      %v448 = vmul.f32 %v224, %v311
      %v449 = vmul.f32 %v225, %v316
      %v450 = vmul.f32 %v226, %v321
      %v451 = vmul.f32 %v227, %v326
      %v452 = vmul.f32 %v228, %v331
      %v453 = vmul.f32 %v229, %v336
      %v454 = vmul.f32 %v230, %v341
      %v455 = vmul.f32 %v231, %v346
      %v456 = vmul.f32 %v232, %v351
      %v457 = vmul.f32 %v233, %v356
      %v458 = vmul.f32 %v234, %v361
      %v459 = vmul.f32 %v235, %v366
      %v460 = vmul.f32 %v236, %v371
      %v461 = vmul.f32 %v237, %v376
      %v462 = vmul.f32 %v238, %v381
      %v463 = vmul.f32 %v239, %v386
      %v464 = vmul.f32 %v240, %v391
      %v465 = vmul.f32 %v241, %v396
      %v466 = vmul.f32 %v242, %v401
      %v467 = vmul.f32 %v243, %v406
      %v468 = vmul.f32 %v244, %v411
      %v469 = vmul.f32 %v245, %v416
      %v470 = vmul.f32 %v246, %v421
      %v471 = vmul.f32 %v247, %v426
      %v472 = vmul.f32 %v248, %v431
      %v473 = vmul.f32 %v249, %v436
      %v474 = vmul.f32 %v250, %v441
      %vm475 = vcmask 400384
      %476 = vst.msk [vmem:[%s217] sm:$0xff] %vm475, %v443
      %477 = vst.msk [vmem:[%s217 + $0x8] sm:$0xff] %vm475, %v444
      %478 = vst.msk [vmem:[%s217 + $0x10] sm:$0xff] %vm475, %v445
      %479 = vst.msk [vmem:[%s217 + $0x18] sm:$0xff] %vm475, %v446
      %480 = vst.msk [vmem:[%s217 + $0x20] sm:$0xff] %vm475, %v447
      %481 = vst.msk [vmem:[%s217 + $0x28] sm:$0xff] %vm475, %v448
      %482 = vst.msk [vmem:[%s217 + $0x30] sm:$0xff] %vm475, %v449
      %483 = vst.msk [vmem:[%s217 + $0x38] sm:$0xff] %vm475, %v450
      %484 = vst.msk [vmem:[%s217 + $0x40] sm:$0xff] %vm475, %v451
      %485 = vst.msk [vmem:[%s217 + $0x48] sm:$0xff] %vm475, %v452
      %486 = vst.msk [vmem:[%s217 + $0x50] sm:$0xff] %vm475, %v453
      %487 = vst.msk [vmem:[%s217 + $0x58] sm:$0xff] %vm475, %v454
      %488 = vst.msk [vmem:[%s217 + $0x60] sm:$0xff] %vm475, %v455
      %489 = vst.msk [vmem:[%s217 + $0x68] sm:$0xff] %vm475, %v456
      %490 = vst.msk [vmem:[%s217 + $0x70] sm:$0xff] %vm475, %v457
      %491 = vst.msk [vmem:[%s217 + $0x78] sm:$0xff] %vm475, %v458
      %492 = vst.msk [vmem:[%s217 + $0x80] sm:$0xff] %vm475, %v459
      %493 = vst.msk [vmem:[%s217 + $0x88] sm:$0xff] %vm475, %v460
      %494 = vst.msk [vmem:[%s217 + $0x90] sm:$0xff] %vm475, %v461
      %495 = vst.msk [vmem:[%s217 + $0x98] sm:$0xff] %vm475, %v462
      %496 = vst.msk [vmem:[%s217 + $0xa0] sm:$0xff] %vm475, %v463
      %497 = vst.msk [vmem:[%s217 + $0xa8] sm:$0xff] %vm475, %v464
      %498 = vst.msk [vmem:[%s217 + $0xb0] sm:$0xff] %vm475, %v465
      %499 = vst.msk [vmem:[%s217 + $0xb8] sm:$0xff] %vm475, %v466
      %500 = vst.msk [vmem:[%s217 + $0xc0] sm:$0xff] %vm475, %v467
      %501 = vst.msk [vmem:[%s217 + $0xc8] sm:$0xff] %vm475, %v468
      %502 = vst.msk [vmem:[%s217 + $0xd0] sm:$0xff] %vm475, %v469
      %503 = vst.msk [vmem:[%s217 + $0xd8] sm:$0xff] %vm475, %v470
      %504 = vst.msk [vmem:[%s217 + $0xe0] sm:$0xff] %vm475, %v471
      %505 = vst.msk [vmem:[%s217 + $0xe8] sm:$0xff] %vm475, %v472
      %506 = vst.msk [vmem:[%s217 + $0xf0] sm:$0xff] %vm475, %v473
      %507 = vst.msk [vmem:[%s217 + $0xf8] sm:$0xff] %vm475, %v474
      %s508 = smul.u32 32, %s18
      %p509 = scmp.lt.s32.totalorder %s17, 1
      %s510 = scalar_select %p509, %s17, 1
      %p511 = scmp.lt.s32.totalorder %s508, 31
      %s512 = scalar_select %p511, %s508, 31
      %s513 = smul.addr %s510, 32
      %s514 = sadd.s32 %s512, %s513
      %s515 = smul.addr %s514, 8
      %s516 = scalar_lea.vmem %s2, %s515
      // Predicated region
      $region29: #{tpu_custom_call.1} parent=27 // pred_check
        %p517 = pneg %p101
      $region30: #{tpu_custom_call.1} parent=27 // pred_check_branch
        %519 = sbr.rel (%p517) target = $region32
      $region31: #{tpu_custom_call.1} parent=27 // pred_region
        %s520 = smul.u32 32, %s18
      $region32: #{tpu_custom_call.1} parent=27 // pred_fallthru
        _
    $region28: #{tpu_custom_call.1} parent=5 // pred_fallthru
      _
    %p521 = scmp.le.s32.totalorder 2, %s8
    // Predicated region
    $region33: #{tpu_custom_call.1} parent=5 // pred_check
      %p522 = pneg %p521
    $region34: #{tpu_custom_call.1} parent=5 // pred_check_branch
      %524 = sbr.rel (%p522) target = $region36
    $region35: #{tpu_custom_call.1} parent=5 // pred_region
      %s525 = ssub.s32 %s8, 2
      // Predicated region
      $region37: #{tpu_custom_call.1} parent=35 // pred_check
        %p526 = pneg %p107
      $region38: #{tpu_custom_call.1} parent=35 // pred_check_branch
        %528 = sbr.rel (%p526) target = $region40
      $region39: #{tpu_custom_call.1} parent=35 // pred_region
        %s529 = smul.u32 32, %s20
        %p530 = scmp.lt.s32.totalorder %s19, 1
        %s531 = scalar_select %p530, %s19, 1
        %p532 = scmp.lt.s32.totalorder %s529, 31
        %s533 = scalar_select %p532, %s529, 31
        %s534 = smul.addr %s531, 32
        %s535 = sadd.s32 %s533, %s534
        %s536 = smul.addr %s535, 8
        %s537 = scalar_lea.vmem %s2, %s536
      $region40: #{tpu_custom_call.1} parent=35 // pred_fallthru
        _
    $region36: #{tpu_custom_call.1} parent=5 // pred_fallthru
      _
  $region6: #{tpu_custom_call.1} parent=0 // loop_footer
    %s12 = sadd.s32 1, %s8
  $region7: #{tpu_custom_call.1} parent=0 // loop_footer_branch
    %7 = sbr.rel target = $region3
  $region8: #{tpu_custom_call.1} parent=0 // loop_exit
    _

</llo_original>
